<compile_context>
chip_gen: v7x
topology: tpu7x:2x2x1
jax: 0.10.0
libtpu: 0.0.40
codegen_flags: <defaults>
</compile_context>

<pallas_src>
import functools

import jax
import jax.numpy as jnp
from jax import lax
from jax.experimental import pallas as pl
from jax.experimental.pallas import tpu as pltpu

LAMBDA_DICE = 0.85
LAMBDA_CE = 0.15
SMOOTH_NR = 1e-5          # MONAI DiceLoss defaults
SMOOTH_DR = 1e-5
LANE = 128
_SUB = 8                  # f32 sublanes per vreg
_VMEM_BUDGET = 24 << 20   # bytes for the double-buffered input blocks
_MAX_TILE_ROWS = 2048     # >=512-row blocks already sit near HBM roofline
                          # (v6e with huge volumes could go higher; v7x should not)


def _dice_ce_kernel(p_ref, y_ref, inter_ref, denom_ref, ce_ref,
                    *, n_channels, tile_rows, hw_valid, need_mask):
    """Processes one (C, tile_rows, 128) slab of one batch element per grid step.

    grid = (B, n_spatial_tiles).  The three outputs are per-batch, vreg-sized
    partial sums that stay VMEM-resident across the inner ("arbitrary") spatial
    axis; the batch axis carries no state and is "parallel".
    """
    i = pl.program_id(1)

    @pl.when(i == 0)
    def _():
        inter_ref[...] = jnp.zeros_like(inter_ref)
        denom_ref[...] = jnp.zeros_like(denom_ref)
        ce_ref[...] = jnp.zeros_like(ce_ref)

    p = p_ref[...].astype(jnp.float32)    # (C, TM, 128) logits
    y = y_ref[...].astype(jnp.float32)    # (C, TM, 128) one-hot target

    if need_mask:
        row = lax.broadcasted_iota(jnp.int32, (tile_rows, LANE), 0)
        col = lax.broadcasted_iota(jnp.int32, (tile_rows, LANE), 1)
        gidx = (i * tile_rows + row) * LANE + col        # flat spatial index
        valid = gidx < hw_valid                          # (TM, 128)
        maskf = valid.astype(jnp.float32)
        # Sanitize BEFORE any transcendental: partial edge blocks can contain
        # unspecified (possibly Inf/NaN) data past the end of the array.
        p = jnp.where(valid[None], p, 0.0)
        y = jnp.where(valid[None], y, 0.0)

    # ---- Dice partial sums (sigmoid activation; batch=True) -------------------
    pd = jax.nn.sigmoid(p)
    if need_mask:
        pd = pd * maskf[None]
    inter = pd * y            # numerator terms
    denom = pd + y            # merged denominator terms (sum(pd) + sum(y))

    # ---- Cross-entropy partial sums (softmax over channel axis) ---------------
    if n_channels == 2:
        # lse = max(p0,p1) + log(1 + exp(-|p0-p1|)): 1 exp + 1 log per pixel.
        p0, p1 = p[0], p[1]
        lse = jnp.maximum(p0, p1) + jnp.log(1.0 + jnp.exp(-jnp.abs(p0 - p1)))
    else:
        pmax = jnp.max(p, axis=0)
        lse = jnp.log(jnp.sum(jnp.exp(p - pmax[None]), axis=0)) + pmax
    sel = jnp.sum(p * y, axis=0)          # y strictly one-hot -> target logit
    ce = lse - sel                        # (TM, 128)
    if need_mask:
        ce = ce * maskf

    # ---- vreg-group partial reduction into the tiny resident accumulators -----
    g = tile_rows // _SUB
    inter_ref[...] += inter.reshape(n_channels, g, _SUB, LANE).sum(axis=1)
    denom_ref[...] += denom.reshape(n_channels, g, _SUB, LANE).sum(axis=1)
    ce_ref[...] += ce.reshape(g, _SUB, LANE).sum(axis=0)


def _pick_tile_rows(n_rows, n_channels, bytes_per_px, max_tile_rows):
    """Rows (of 128 lanes) per block: large, VMEM-budgeted, balanced, mult of 8."""
    per_row = 2 * n_channels * LANE * bytes_per_px       # double-buffered inputs
    cap = max(_SUB, min(max_tile_rows, _VMEM_BUDGET // per_row))
    cap = max(_SUB, min((cap // _SUB) * _SUB, (n_rows // _SUB) * _SUB))
    n_tiles = pl.cdiv(n_rows, cap)
    tr = pl.cdiv(n_rows, n_tiles)                        # balanced tiles
    tr = ((tr + _SUB - 1) // _SUB) * _SUB
    return max(_SUB, min(tr, (n_rows // _SUB) * _SUB))


def loss_flood(p_nchw, y_nchw, *, max_tile_rows=_MAX_TILE_ROWS):
    """p_nchw: logits (B, C, *spatial); y_nchw: one-hot target, same shape."""
    assert y_nchw.shape == p_nchw.shape
    B, C = p_nchw.shape[:2]
    assert C >= 2, "include_background=False needs at least 2 channels"

    hw = 1
    for d in p_nchw.shape[2:]:
        hw *= d

    n_rows = max(pl.cdiv(hw, LANE), _SUB)
    hw_pad = n_rows * LANE

    # Free reshapes only; a pad copy happens only when H*W isn't lane-aligned.
    p3 = p_nchw.reshape(B, C, hw)
    y3 = y_nchw.reshape(B, C, hw)
    if hw_pad != hw:
        p3 = jnp.pad(p3, ((0, 0), (0, 0), (0, hw_pad - hw)))
        y3 = jnp.pad(y3, ((0, 0), (0, 0), (0, hw_pad - hw)))
    p4 = p3.reshape(B, C, n_rows, LANE)
    y4 = y3.reshape(B, C, n_rows, LANE)

    bytes_per_px = p_nchw.dtype.itemsize + y_nchw.dtype.itemsize
    tile_rows = _pick_tile_rows(n_rows, C, bytes_per_px, max_tile_rows)
    n_tiles = pl.cdiv(n_rows, tile_rows)
    # Mask needed if padded lanes exist or the last spatial block is partial.
    need_mask = (hw_pad != hw) or (n_rows % tile_rows != 0)

    kernel = functools.partial(
        _dice_ce_kernel, n_channels=C, tile_rows=tile_rows,
        hw_valid=hw, need_mask=need_mask)

    in_block = (pl.Squeezed(), C, tile_rows, LANE)
    in_map = lambda b, i: (b, 0, i, 0)

    inter_out, denom_out, ce_out = pl.pallas_call(
        kernel,
        out_shape=(
            jax.ShapeDtypeStruct((B, C, _SUB, LANE), jnp.float32),
            jax.ShapeDtypeStruct((B, C, _SUB, LANE), jnp.float32),
            jax.ShapeDtypeStruct((B, _SUB, LANE), jnp.float32),
        ),
        grid_spec=pltpu.PrefetchScalarGridSpec(
            num_scalar_prefetch=0,
            grid=(B, n_tiles),
            in_specs=[
                pl.BlockSpec(in_block, in_map),
                pl.BlockSpec(in_block, in_map),
            ],
            out_specs=[
                pl.BlockSpec((pl.Squeezed(), C, _SUB, LANE), lambda b, i: (b, 0, 0, 0)),
                pl.BlockSpec((pl.Squeezed(), C, _SUB, LANE), lambda b, i: (b, 0, 0, 0)),
                pl.BlockSpec((pl.Squeezed(), _SUB, LANE), lambda b, i: (b, 0, 0)),
            ],
        ),
        compiler_params=pltpu.CompilerParams(
            # batch axis has no cross-step carry -> "parallel" (v7x: 2 TCs);
            # spatial axis accumulates into the resident out blocks -> "arbitrary".
            dimension_semantics=("parallel", "arbitrary"),
            vmem_limit_bytes=32 * 1024 * 1024,
        ),
    )(p4, y4)

    # Trivial final combine on (B, C, 8, 128)-sized partials (a few KB of work).
    inter_c = jnp.sum(inter_out, axis=(0, 2, 3))          # (C,)
    denom_c = jnp.sum(denom_out, axis=(0, 2, 3))          # (C,)
    # include_background=False: drop channel 0; mean over remaining channels.
    dice_loss = jnp.mean(1.0 - (2.0 * inter_c[1:] + SMOOTH_NR)
                         / (denom_c[1:] + SMOOTH_DR))
    ce_loss = jnp.sum(ce_out) / float(B * hw)
    return LAMBDA_DICE * dice_loss + LAMBDA_CE * ce_loss


def _reference_loss(p, y):
    """Pure-JAX mirror of MONAI DiceCELoss with the module's settings."""
    pd = jax.nn.sigmoid(p)
    pf, yf = pd[:, 1:], y[:, 1:]                      # include_background=False
    axes = (0, 2, 3)                                  # batch=True
    inter = jnp.sum(pf * yf, axis=axes)
    denom = jnp.sum(pf, axis=axes) + jnp.sum(yf, axis=axes)
    dice = jnp.mean(1.0 - (2.0 * inter + SMOOTH_NR) / (denom + SMOOTH_DR))
    tgt = jnp.argmax(y, axis=1)
    logp = jax.nn.log_softmax(p, axis=1)
    ce = -jnp.mean(jnp.take_along_axis(logp, tgt[:, None], axis=1))
    return LAMBDA_DICE * dice + LAMBDA_CE * ce


if __name__ == "__main__":
    key = jax.random.PRNGKey(0)

    def _make(k, B, C, H, W):
        kp, ky = jax.random.split(k)
        p = jax.random.normal(kp, (B, C, H, W), dtype=jnp.float32)
        labels = jax.random.randint(ky, (B, H, W), 0, C)
        y = jnp.transpose(jax.nn.one_hot(labels, C, dtype=jnp.float32),
                          (0, 3, 1, 2))
        return p, y

    # Test 1: small binary (background / flood) segmentation; lane-pad path.
    p, y = _make(key, 2, 2, 16, 16)
    loss = jax.block_until_ready(jax.jit(loss_flood)(p, y))
    ref = _reference_loss(p, y)
    assert jnp.allclose(loss, ref, rtol=1e-5, atol=1e-5), (loss, ref)

    # Test 2: ragged spatial size + 3 channels (generic lse path + mask).
    p2, y2 = _make(jax.random.fold_in(key, 1), 2, 3, 10, 10)
    loss2 = jax.block_until_ready(jax.jit(loss_flood)(p2, y2))
    ref2 = _reference_loss(p2, y2)
    assert jnp.allclose(loss2, ref2, rtol=1e-5, atol=1e-5), (loss2, ref2)

    # Test 3: multi-tile spatial grid with a partial Pallas edge block
    # (no wrapper padding at all; exercises the in-kernel sanitize + mask).
    p3, y3 = _make(jax.random.fold_in(key, 2), 2, 2, 128, 128)
    f3 = jax.jit(functools.partial(loss_flood, max_tile_rows=48))
    loss3 = jax.block_until_ready(f3(p3, y3))
    ref3 = _reference_loss(p3, y3)
    assert jnp.allclose(loss3, ref3, rtol=1e-5, atol=1e-5), (loss3, ref3)

    # Test 4: same data, default tiling -> single full tile, no mask path.
    loss4 = jax.block_until_ready(jax.jit(loss_flood)(p3, y3))
    assert jnp.allclose(loss4, ref3, rtol=1e-5, atol=1e-5), (loss4, ref3)

    print("KERNEL_OK")
</pallas_src>

<mosaic_0001>
module attributes {stable_mosaic.version = 11 : i64} {
  func.func @_dice_ce_kernel(%arg0: i32, %arg1: i32, %arg2: memref<1x2x8x128xf32, #tpu.memory_space<vmem>>, %arg3: memref<1x2x8x128xf32, #tpu.memory_space<vmem>>, %arg4: memref<1x2x8x128xf32, #tpu.memory_space<vmem>>, %arg5: memref<1x2x8x128xf32, #tpu.memory_space<vmem>>, %arg6: memref<1x8x128xf32, #tpu.memory_space<vmem>>) attributes {dimension_semantics = [#tpu.dimension_semantics<parallel>, #tpu.dimension_semantics<arbitrary>], iteration_bounds = array<i64: 2, 1>, scalar_prefetch = 0 : i64, scratch_operands = 0 : i64, tpu.core_type = #tpu.core_type<tc>, window_params = [{transform_indices = @transform_0, window_bounds = array<i64: 1, 2, 8, 128>}, {transform_indices = @transform_1, window_bounds = array<i64: 1, 2, 8, 128>}, {transform_indices = @transform_2, window_bounds = array<i64: 1, 2, 8, 128>}, {transform_indices = @transform_3, window_bounds = array<i64: 1, 2, 8, 128>}, {transform_indices = @transform_4, window_bounds = array<i64: 1, 8, 128>}]} {
    %c0_i32 = arith.constant 0 : i32
    %0 = arith.cmpi eq, %arg1, %c0_i32 : i32
    %1 = arith.extui %0 : i1 to i32
    %c0_i32_0 = arith.constant 0 : i32
    %2 = arith.cmpi ne, %1, %c0_i32_0 : i32
    scf.if %2 {
      %cst_38 = arith.constant 0.000000e+00 : f32
      %81 = vector.broadcast %cst_38 : f32 to vector<2x8x128xf32>
      %c0_39 = arith.constant 0 : index
      %c0_40 = arith.constant 0 : index
      %c0_41 = arith.constant 0 : index
      %c0_42 = arith.constant 0 : index
      %82 = vector.load %arg4[%c0_39, %c0_40, %c0_41, %c0_42] : memref<1x2x8x128xf32, #tpu.memory_space<vmem>>, vector<1x2x8x128xf32>
      %83 = vector.shape_cast %82 : vector<1x2x8x128xf32> to vector<2x8x128xf32>
      %84 = vector.shape_cast %81 : vector<2x8x128xf32> to vector<1x2x8x128xf32>
      tpu.vector_store %arg4[%c0_39, %c0_40, %c0_41, %c0_42], %84 {strides = array<i32>} : memref<1x2x8x128xf32, #tpu.memory_space<vmem>>, vector<1x2x8x128xf32>,
      %cst_43 = arith.constant 0.000000e+00 : f32
      %85 = vector.broadcast %cst_43 : f32 to vector<2x8x128xf32>
      %c0_44 = arith.constant 0 : index
      %c0_45 = arith.constant 0 : index
      %c0_46 = arith.constant 0 : index
      %c0_47 = arith.constant 0 : index
      %86 = vector.load %arg5[%c0_44, %c0_45, %c0_46, %c0_47] : memref<1x2x8x128xf32, #tpu.memory_space<vmem>>, vector<1x2x8x128xf32>
      %87 = vector.shape_cast %86 : vector<1x2x8x128xf32> to vector<2x8x128xf32>
      %88 = vector.shape_cast %85 : vector<2x8x128xf32> to vector<1x2x8x128xf32>
      tpu.vector_store %arg5[%c0_44, %c0_45, %c0_46, %c0_47], %88 {strides = array<i32>} : memref<1x2x8x128xf32, #tpu.memory_space<vmem>>, vector<1x2x8x128xf32>,
      %cst_48 = arith.constant 0.000000e+00 : f32
      %89 = vector.broadcast %cst_48 : f32 to vector<8x128xf32>
      %c0_49 = arith.constant 0 : index
      %c0_50 = arith.constant 0 : index
      %c0_51 = arith.constant 0 : index
      %90 = vector.load %arg6[%c0_49, %c0_50, %c0_51] : memref<1x8x128xf32, #tpu.memory_space<vmem>>, vector<1x8x128xf32>
      %91 = vector.shape_cast %90 : vector<1x8x128xf32> to vector<8x128xf32>
      %92 = vector.shape_cast %89 : vector<8x128xf32> to vector<1x8x128xf32>
      tpu.vector_store %arg6[%c0_49, %c0_50, %c0_51], %92 {strides = array<i32>} : memref<1x8x128xf32, #tpu.memory_space<vmem>>, vector<1x8x128xf32>,
    } else {
    }
    %c0 = arith.constant 0 : index
    %c0_1 = arith.constant 0 : index
    %c0_2 = arith.constant 0 : index
    %c0_3 = arith.constant 0 : index
    %3 = vector.load %arg2[%c0, %c0_1, %c0_2, %c0_3] : memref<1x2x8x128xf32, #tpu.memory_space<vmem>>, vector<1x2x8x128xf32>
    %4 = vector.shape_cast %3 : vector<1x2x8x128xf32> to vector<2x8x128xf32>
    %c0_4 = arith.constant 0 : index
    %c0_5 = arith.constant 0 : index
    %c0_6 = arith.constant 0 : index
    %c0_7 = arith.constant 0 : index
    %5 = vector.load %arg3[%c0_4, %c0_5, %c0_6, %c0_7] : memref<1x2x8x128xf32, #tpu.memory_space<vmem>>, vector<1x2x8x128xf32>
    %6 = vector.shape_cast %5 : vector<1x2x8x128xf32> to vector<2x8x128xf32>
    %7 = tpu.iota {dimensions = array<i32: 0>} : vector<8x128xi32>
    %8 = tpu.iota {dimensions = array<i32: 1>} : vector<8x128xi32>
    %c8_i32 = arith.constant 8 : i32
    %9 = arith.muli %arg1, %c8_i32 : i32
    %10 = vector.broadcast %9 : i32 to vector<8x128xi32>
    %11 = arith.addi %10, %7 : vector<8x128xi32>
    %c128_i32 = arith.constant 128 : i32
    %12 = vector.broadcast %c128_i32 : i32 to vector<8x128xi32>
    %13 = arith.muli %11, %12 : vector<8x128xi32>
    %14 = arith.addi %13, %8 : vector<8x128xi32>
    %c256_i32 = arith.constant 256 : i32
    %15 = vector.broadcast %c256_i32 : i32 to vector<8x128xi32>
    %16 = arith.cmpi slt, %14, %15 : vector<8x128xi32>
    %17 = arith.extui %16 : vector<8x128xi1> to vector<8x128xi32>
    %18 = arith.sitofp %17 : vector<8x128xi32> to vector<8x128xf32>
    %19 = vector.shape_cast %16 : vector<8x128xi1> to vector<1x8x128xi1>
    %cst = arith.constant 0.000000e+00 : f32
    %20 = vector.shape_cast %19 : vector<1x8x128xi1> to vector<1x8x128xi1>
    %21 = vector.broadcast %20 : vector<1x8x128xi1> to vector<2x8x128xi1>
    %22 = vector.broadcast %cst : f32 to vector<2x8x128xf32>
    %23 = arith.select %21, %4, %22 : vector<2x8x128xi1>, vector<2x8x128xf32>
    %24 = vector.shape_cast %16 : vector<8x128xi1> to vector<1x8x128xi1>
    %cst_8 = arith.constant 0.000000e+00 : f32
    %25 = vector.shape_cast %24 : vector<1x8x128xi1> to vector<1x8x128xi1>
    %26 = vector.broadcast %25 : vector<1x8x128xi1> to vector<2x8x128xi1>
    %27 = vector.broadcast %cst_8 : f32 to vector<2x8x128xf32>
    %28 = arith.select %26, %6, %27 : vector<2x8x128xi1>, vector<2x8x128xf32>
    %29 = arith.negf %23 : vector<2x8x128xf32>
    %30 = math.exp %29 : vector<2x8x128xf32>
    %cst_9 = arith.constant 1.000000e+00 : f32
    %31 = vector.broadcast %cst_9 : f32 to vector<2x8x128xf32>
    %32 = arith.addf %31, %30 : vector<2x8x128xf32>
    %33 = arith.divf %31, %32 : vector<2x8x128xf32>
    %34 = vector.shape_cast %18 : vector<8x128xf32> to vector<1x8x128xf32>
    %35 = vector.broadcast %34 : vector<1x8x128xf32> to vector<2x8x128xf32>
    %36 = arith.mulf %33, %35 : vector<2x8x128xf32>
    %37 = arith.mulf %36, %28 : vector<2x8x128xf32>
    %38 = arith.addf %36, %28 : vector<2x8x128xf32>
    %39 = vector.extract_strided_slice %23 {offsets = [0, 0, 0], sizes = [1, 8, 128], strides = [1, 1, 1]} : vector<2x8x128xf32> to vector<1x8x128xf32>
    %40 = vector.shape_cast %39 : vector<1x8x128xf32> to vector<8x128xf32>
    %41 = vector.extract_strided_slice %23 {offsets = [1, 0, 0], sizes = [1, 8, 128], strides = [1, 1, 1]} : vector<2x8x128xf32> to vector<1x8x128xf32>
    %42 = vector.shape_cast %41 : vector<1x8x128xf32> to vector<8x128xf32>
    %43 = arith.maximumf %40, %42 : vector<8x128xf32>
    %44 = arith.subf %40, %42 : vector<8x128xf32>
    %45 = math.absf %44 : vector<8x128xf32>
    %cst_10 = arith.constant 0.000000e+00 : f32
    %46 = vector.broadcast %cst_10 : f32 to vector<8x128xf32>
    %47 = arith.subf %46, %45 : vector<8x128xf32>
    %48 = math.exp %47 : vector<8x128xf32>
    %cst_11 = arith.constant 1.000000e+00 : f32
    %49 = vector.broadcast %cst_11 : f32 to vector<8x128xf32>
    %50 = arith.addf %49, %48 : vector<8x128xf32>
    %51 = math.log %50 : vector<8x128xf32>
    %52 = arith.addf %43, %51 : vector<8x128xf32>
    %53 = arith.mulf %23, %28 : vector<2x8x128xf32>
    %cst_12 = arith.constant dense<0.000000e+00> : vector<8x128xf32>
    %54 = vector.multi_reduction <add>, %53, %cst_12 [0] : vector<2x8x128xf32> to vector<8x128xf32>
    %55 = arith.subf %52, %54 : vector<8x128xf32>
    %56 = arith.mulf %55, %18 : vector<8x128xf32>
    %c0_13 = arith.constant 0 : index
    %c0_14 = arith.constant 0 : index
    %c0_15 = arith.constant 0 : index
    %c0_16 = arith.constant 0 : index
    %57 = vector.load %arg4[%c0_13, %c0_14, %c0_15, %c0_16] : memref<1x2x8x128xf32, #tpu.memory_space<vmem>>, vector<1x2x8x128xf32>
    %58 = vector.shape_cast %57 : vector<1x2x8x128xf32> to vector<2x8x128xf32>
    %59 = vector.shape_cast %37 : vector<2x8x128xf32> to vector<2x1x8x128xf32>
    %cst_17 = arith.constant dense<0.000000e+00> : vector<2x8x128xf32>
    %60 = vector.multi_reduction <add>, %59, %cst_17 [1] : vector<2x1x8x128xf32> to vector<2x8x128xf32>
    %61 = arith.addf %58, %60 : vector<2x8x128xf32>
    %c0_18 = arith.constant 0 : index
    %c0_19 = arith.constant 0 : index
    %c0_20 = arith.constant 0 : index
    %c0_21 = arith.constant 0 : index
    %62 = vector.load %arg4[%c0_18, %c0_19, %c0_20, %c0_21] : memref<1x2x8x128xf32, #tpu.memory_space<vmem>>, vector<1x2x8x128xf32>
    %63 = vector.shape_cast %62 : vector<1x2x8x128xf32> to vector<2x8x128xf32>
    %64 = vector.shape_cast %61 : vector<2x8x128xf32> to vector<1x2x8x128xf32>
    tpu.vector_store %arg4[%c0_18, %c0_19, %c0_20, %c0_21], %64 {strides = array<i32>} : memref<1x2x8x128xf32, #tpu.memory_space<vmem>>, vector<1x2x8x128xf32>,
    %c0_22 = arith.constant 0 : index
    %c0_23 = arith.constant 0 : index
    %c0_24 = arith.constant 0 : index
    %c0_25 = arith.constant 0 : index
    %65 = vector.load %arg5[%c0_22, %c0_23, %c0_24, %c0_25] : memref<1x2x8x128xf32, #tpu.memory_space<vmem>>, vector<1x2x8x128xf32>
    %66 = vector.shape_cast %65 : vector<1x2x8x128xf32> to vector<2x8x128xf32>
    %67 = vector.shape_cast %38 : vector<2x8x128xf32> to vector<2x1x8x128xf32>
    %cst_26 = arith.constant dense<0.000000e+00> : vector<2x8x128xf32>
    %68 = vector.multi_reduction <add>, %67, %cst_26 [1] : vector<2x1x8x128xf32> to vector<2x8x128xf32>
    %69 = arith.addf %66, %68 : vector<2x8x128xf32>
    %c0_27 = arith.constant 0 : index
    %c0_28 = arith.constant 0 : index
    %c0_29 = arith.constant 0 : index
    %c0_30 = arith.constant 0 : index
    %70 = vector.load %arg5[%c0_27, %c0_28, %c0_29, %c0_30] : memref<1x2x8x128xf32, #tpu.memory_space<vmem>>, vector<1x2x8x128xf32>
    %71 = vector.shape_cast %70 : vector<1x2x8x128xf32> to vector<2x8x128xf32>
    %72 = vector.shape_cast %69 : vector<2x8x128xf32> to vector<1x2x8x128xf32>
    tpu.vector_store %arg5[%c0_27, %c0_28, %c0_29, %c0_30], %72 {strides = array<i32>} : memref<1x2x8x128xf32, #tpu.memory_space<vmem>>, vector<1x2x8x128xf32>,
    %c0_31 = arith.constant 0 : index
    %c0_32 = arith.constant 0 : index
    %c0_33 = arith.constant 0 : index
    %73 = vector.load %arg6[%c0_31, %c0_32, %c0_33] : memref<1x8x128xf32, #tpu.memory_space<vmem>>, vector<1x8x128xf32>
    %74 = vector.shape_cast %73 : vector<1x8x128xf32> to vector<8x128xf32>
    %75 = vector.shape_cast %56 : vector<8x128xf32> to vector<1x8x128xf32>
    %cst_34 = arith.constant dense<0.000000e+00> : vector<8x128xf32>
    %76 = vector.multi_reduction <add>, %75, %cst_34 [0] : vector<1x8x128xf32> to vector<8x128xf32>
    %77 = arith.addf %74, %76 : vector<8x128xf32>
    %c0_35 = arith.constant 0 : index
    %c0_36 = arith.constant 0 : index
    %c0_37 = arith.constant 0 : index
    %78 = vector.load %arg6[%c0_35, %c0_36, %c0_37] : memref<1x8x128xf32, #tpu.memory_space<vmem>>, vector<1x8x128xf32>
    %79 = vector.shape_cast %78 : vector<1x8x128xf32> to vector<8x128xf32>
    %80 = vector.shape_cast %77 : vector<8x128xf32> to vector<1x8x128xf32>
    tpu.vector_store %arg6[%c0_35, %c0_36, %c0_37], %80 {strides = array<i32>} : memref<1x8x128xf32, #tpu.memory_space<vmem>>, vector<1x8x128xf32>,
    return
  }
  func.func @transform_0(%arg0: i32, %arg1: i32) -> (i32, i32, i32, i32) {
    %c0_i32 = arith.constant 0 : i32
    %c0_i32_0 = arith.constant 0 : i32
    %c0_i32_1 = arith.constant 0 : i32
    return %arg0, %c0_i32, %arg1, %c0_i32_0 : i32, i32, i32, i32
  }
  func.func @transform_1(%arg0: i32, %arg1: i32) -> (i32, i32, i32, i32) {
    %c0_i32 = arith.constant 0 : i32
    %c0_i32_0 = arith.constant 0 : i32
    %c0_i32_1 = arith.constant 0 : i32
    return %arg0, %c0_i32, %arg1, %c0_i32_0 : i32, i32, i32, i32
  }
  func.func @transform_2(%arg0: i32, %arg1: i32) -> (i32, i32, i32, i32) {
    %c0_i32 = arith.constant 0 : i32
    %c0_i32_0 = arith.constant 0 : i32
    %c0_i32_1 = arith.constant 0 : i32
    %c0_i32_2 = arith.constant 0 : i32
    return %arg0, %c0_i32, %c0_i32_0, %c0_i32_1 : i32, i32, i32, i32
  }
  func.func @transform_3(%arg0: i32, %arg1: i32) -> (i32, i32, i32, i32) {
    %c0_i32 = arith.constant 0 : i32
    %c0_i32_0 = arith.constant 0 : i32
    %c0_i32_1 = arith.constant 0 : i32
    %c0_i32_2 = arith.constant 0 : i32
    return %arg0, %c0_i32, %c0_i32_0, %c0_i32_1 : i32, i32, i32, i32
  }
  func.func @transform_4(%arg0: i32, %arg1: i32) -> (i32, i32, i32) {
    %c0_i32 = arith.constant 0 : i32
    %c0_i32_0 = arith.constant 0 : i32
    %c0_i32_1 = arith.constant 0 : i32
    return %arg0, %c0_i32, %c0_i32_0 : i32, i32, i32
  }
}

</mosaic_0001>

<llo_original>
// kernel: loss_flood.1
$region0: #{loss_flood.1}
  #allocation0 [shape = 'u32[]', space=smem, size = 0x4, offset = 0x4, fixed_abs, tag = 'smem constant byte address 0x4 - core index']
  #allocation1 [shape = 'u32[144,128]{1,0:T(1,128)}', space=vmem, size = 0x12000, scoped, tag = 'internal scratch']
  %s0 = inlined_call_operand.vmem [shape: f32[2,2,8,128], index: 0, kind: input, shape index: {}]
  %s1 = inlined_call_operand.vmem [shape: f32[2,2,8,128], index: 1, kind: input, shape index: {}]
  %s2 = inlined_call_operand.vmem [shape: f32[2,2,8,128], index: 2, kind: output, shape index: {0}]
  %s3 = inlined_call_operand.vmem [shape: f32[2,2,8,128], index: 3, kind: output, shape index: {1}]
  %s4 = inlined_call_operand.vmem [shape: f32[2,8,128], index: 4, kind: output, shape index: {2}]
  %5 = xla_tuple %s2, %s3, %s4
  %s6 = sld [smem:[#allocation0]]
  $region61: #{loss_flood.1} parent=0
    _
  %s8 = ssub.s32 1, %s6
  %s9 = scalar_select 0, %s8, %s6
  loop: start=0, step=1, limit=4
  $region2: #{loss_flood.1} parent=0 // loop_pre_header
    _
  $region3: #{loss_flood.1} parent=0 // loop_header
    %s11 = sphi 0, %s15
    %p12 = scmp.ge.s32.totalorder %s11, 4
    %s18 = sphi 0, %s30
    %s19 = sphi 0, %s26
    %s20 = sphi 0, %s18
    %s21 = sphi 0, %s19
    %s22 = sphi 0, %s20
    %s23 = sphi 0, %s21
    %s35 = sphi 0, %s37
    %s38 = sphi 0, %s35
    %s39 = sphi 0, %s38
    %s55 = sphi 0, %s39
    %s63 = sphi 0, %s65
    %s66 = sphi 0, %s63
    %s67 = sphi 0, %s66
    %s83 = sphi 0, %s67
    %s89 = sphi 0, %s91
    %s92 = sphi 0, %s89
    %s93 = sphi 0, %s92
    %s109 = sphi 0, %s93
    %s115 = sphi 0, %s117
    %s118 = sphi 0, %s115
    %s119 = sphi 0, %s118
    %s135 = sphi 0, %s119
    %s141 = sphi 0, %s143
    %s144 = sphi 0, %s141
    %s145 = sphi 0, %s144
    %s161 = sphi 0, %s145
  $region4: #{loss_flood.1} parent=0 // loop_header_branch
    %14 = sbr.rel (%p12) target = $region8
  $region5: #{loss_flood.1} parent=0 // loop_body
    %s16 = ssub.s32 %s11, 1
    %s17 = ssub.s32 %s11, 2
    %s24 = sadd.s32 1, %s19
    %p25 = scmp.ge.s32.totalorder %s24, 1
    %s26 = scalar_select %p25, 0, %s24
    %s27 = sadd.s32 1, %s18
    %s28 = scalar_select %p25, %s27, %s18
    %p29 = scmp.ge.s32.totalorder %s28, 2
    %s30 = scalar_select %p29, 0, %s28
    %s31 = ssub.s32 %s18, %s30
    %s32 = ssub.s32 %s19, %s26
    %s33 = sor.u32 %s31, %s32
    %p34 = scmp.eq.s32.totalorder %s33, 0
    %s36 = sadd.s32 %s35, 1
    %s37 = scalar_select %p34, %s35, %s36
    %p40 = pneg %p34
    %p41 = scmp.eq.s32.totalorder %s11, 1
    %p42 = por %p40, %p41
    %p43 = scmp.ne.s32.totalorder %s35, %s38
    %p44 = scmp.eq.s32.totalorder %s11, 0
    %p45 = por %p43, %p44
    %p46 = scmp.ne.s32.totalorder %s35, %s38
    %p47 = scmp.eq.s32.totalorder %s16, 1
    %p48 = por %p46, %p47
    %p49 = scmp.ne.s32.totalorder %s38, %s39
    %p50 = scmp.eq.s32.totalorder %s16, 0
    %p51 = por %p49, %p50
    %p52 = scmp.ne.s32.totalorder %s38, %s39
    %p53 = scmp.eq.s32.totalorder %s17, 1
    %p54 = por %p52, %p53
    %p56 = scmp.ne.s32.totalorder %s39, %s55
    %p57 = scmp.eq.s32.totalorder %s17, 0
    %p58 = por %p56, %p57
    %s59 = ssub.s32 %s18, %s30
    %s60 = ssub.s32 %s19, %s26
    %s61 = sor.u32 %s59, %s60
    %p62 = scmp.eq.s32.totalorder %s61, 0
    %s64 = sadd.s32 %s63, 1
    %s65 = scalar_select %p62, %s63, %s64
    %p68 = pneg %p62
    %p69 = scmp.eq.s32.totalorder %s11, 1
    %p70 = por %p68, %p69
    %p71 = scmp.ne.s32.totalorder %s63, %s66
    %p72 = scmp.eq.s32.totalorder %s11, 0
    %p73 = por %p71, %p72
    %p74 = scmp.ne.s32.totalorder %s63, %s66
    %p75 = scmp.eq.s32.totalorder %s16, 1
    %p76 = por %p74, %p75
    %p77 = scmp.ne.s32.totalorder %s66, %s67
    %p78 = scmp.eq.s32.totalorder %s16, 0
    %p79 = por %p77, %p78
    %p80 = scmp.ne.s32.totalorder %s66, %s67
    %p81 = scmp.eq.s32.totalorder %s17, 1
    %p82 = por %p80, %p81
    %p84 = scmp.ne.s32.totalorder %s67, %s83
    %p85 = scmp.eq.s32.totalorder %s17, 0
    %p86 = por %p84, %p85
    %s87 = ssub.s32 %s18, %s30
    %p88 = scmp.eq.s32.totalorder %s87, 0
    %s90 = sadd.s32 %s89, 1
    %s91 = scalar_select %p88, %s89, %s90
    %p94 = pneg %p88
    %p95 = scmp.eq.s32.totalorder %s11, 1
    %p96 = por %p94, %p95
    %p97 = scmp.ne.s32.totalorder %s89, %s92
    %p98 = scmp.eq.s32.totalorder %s11, 0
    %p99 = por %p97, %p98
    %p100 = scmp.ne.s32.totalorder %s89, %s92
    %p101 = scmp.eq.s32.totalorder %s16, 1
    %p102 = por %p100, %p101
    %p103 = scmp.ne.s32.totalorder %s92, %s93
    %p104 = scmp.eq.s32.totalorder %s16, 0
    %p105 = por %p103, %p104
    %p106 = scmp.ne.s32.totalorder %s92, %s93
    %p107 = scmp.eq.s32.totalorder %s17, 1
    %p108 = por %p106, %p107
    %p110 = scmp.ne.s32.totalorder %s93, %s109
    %p111 = scmp.eq.s32.totalorder %s17, 0
    %p112 = por %p110, %p111
    %s113 = ssub.s32 %s18, %s30
    %p114 = scmp.eq.s32.totalorder %s113, 0
    %s116 = sadd.s32 %s115, 1
    %s117 = scalar_select %p114, %s115, %s116
    %p120 = pneg %p114
    %p121 = scmp.eq.s32.totalorder %s11, 1
    %p122 = por %p120, %p121
    %p123 = scmp.ne.s32.totalorder %s115, %s118
    %p124 = scmp.eq.s32.totalorder %s11, 0
    %p125 = por %p123, %p124
    %p126 = scmp.ne.s32.totalorder %s115, %s118
    %p127 = scmp.eq.s32.totalorder %s16, 1
    %p128 = por %p126, %p127
    %p129 = scmp.ne.s32.totalorder %s118, %s119
    %p130 = scmp.eq.s32.totalorder %s16, 0
    %p131 = por %p129, %p130
    %p132 = scmp.ne.s32.totalorder %s118, %s119
    %p133 = scmp.eq.s32.totalorder %s17, 1
    %p134 = por %p132, %p133
    %p136 = scmp.ne.s32.totalorder %s119, %s135
    %p137 = scmp.eq.s32.totalorder %s17, 0
    %p138 = por %p136, %p137
    %s139 = ssub.s32 %s18, %s30
    %p140 = scmp.eq.s32.totalorder %s139, 0
    %s142 = sadd.s32 %s141, 1
    %s143 = scalar_select %p140, %s141, %s142
    %p146 = pneg %p140
    %p147 = scmp.eq.s32.totalorder %s11, 1
    %p148 = por %p146, %p147
    %p149 = scmp.ne.s32.totalorder %s141, %s144
    %p150 = scmp.eq.s32.totalorder %s11, 0
    %p151 = por %p149, %p150
    %p152 = scmp.ne.s32.totalorder %s141, %s144
    %p153 = scmp.eq.s32.totalorder %s16, 1
    %p154 = por %p152, %p153
    %p155 = scmp.ne.s32.totalorder %s144, %s145
    %p156 = scmp.eq.s32.totalorder %s16, 0
    %p157 = por %p155, %p156
    %p158 = scmp.ne.s32.totalorder %s144, %s145
    %p159 = scmp.eq.s32.totalorder %s17, 1
    %p160 = por %p158, %p159
    %p162 = scmp.ne.s32.totalorder %s145, %s161
    %p163 = scmp.eq.s32.totalorder %s17, 0
    %p164 = por %p162, %p163
    %p165 = scmp.le.s32.totalorder 1, %s11
    %p166 = scmp.lt.s32.totalorder %s11, 3
    %p167 = pnand %p165, %p166
    %p168 = pneg %p167
    // Predicated region
    $region9: #{loss_flood.1} parent=5 // pred_check
      _
    $region10: #{loss_flood.1} parent=5 // pred_check_branch
      %170 = sbr.rel (%p167) target = $region12
    $region11: #{loss_flood.1} parent=5 // pred_region
      %s171 = ssub.s32 %s11, 1
    $region12: #{loss_flood.1} parent=5 // pred_fallthru
      _
    %p172 = scmp.lt.s32.totalorder %s11, 2
    // Predicated region
    $region13: #{loss_flood.1} parent=5 // pred_check
      %p173 = pneg %p172
    $region14: #{loss_flood.1} parent=5 // pred_check_branch
      %175 = sbr.rel (%p173) target = $region16
    $region15: #{loss_flood.1} parent=5 // pred_region
      // Predicated region
      $region17: #{loss_flood.1} parent=15 // pred_check
        %p176 = pneg %p45
      $region18: #{loss_flood.1} parent=15 // pred_check_branch
        %178 = sbr.rel (%p176) target = $region20
      $region19: #{loss_flood.1} parent=15 // pred_region
        %p179 = scmp.lt.s32.totalorder %s18, 1
        %s180 = scalar_select %p179, %s18, 1
        %p181 = scmp.lt.s32.totalorder %s19, 0
        %s182 = scalar_select %p181, %s19, 0
        %s183 = smul.addr %s180, 2
        %s184 = sadd.s32 %s182, %s183
        %s185 = smul.addr %s184, 8
        %s186 = scalar_lea.vmem %s0, %s185
      $region20: #{loss_flood.1} parent=15 // pred_fallthru
        _
      // Predicated region
      $region21: #{loss_flood.1} parent=15 // pred_check
        %p187 = pneg %p73
      $region22: #{loss_flood.1} parent=15 // pred_check_branch
        %189 = sbr.rel (%p187) target = $region24
      $region23: #{loss_flood.1} parent=15 // pred_region
        %p190 = scmp.lt.s32.totalorder %s18, 1
        %s191 = scalar_select %p190, %s18, 1
        %p192 = scmp.lt.s32.totalorder %s19, 0
        %s193 = scalar_select %p192, %s19, 0
        %s194 = smul.addr %s191, 2
        %s195 = sadd.s32 %s193, %s194
        %s196 = smul.addr %s195, 8
        %s197 = scalar_lea.vmem %s1, %s196
      $region24: #{loss_flood.1} parent=15 // pred_fallthru
        _
    $region16: #{loss_flood.1} parent=5 // pred_fallthru
      _
    %p198 = scmp.le.s32.totalorder 1, %s11
    %p199 = scmp.lt.s32.totalorder %s11, 3
    %p200 = pnand %p198, %p199
    %p201 = pneg %p200
    // Predicated region
    $region25: #{loss_flood.1} parent=5 // pred_check
      _
    $region26: #{loss_flood.1} parent=5 // pred_check_branch
      %203 = sbr.rel (%p200) target = $region28
    $region27: #{loss_flood.1} parent=5 // pred_region
      %s204 = ssub.s32 %s11, 1
      %p205 = scmp.lt.s32.totalorder %s20, 1
      %s206 = scalar_select %p205, %s20, 1
      %p207 = scmp.lt.s32.totalorder %s21, 0
      %s208 = scalar_select %p207, %s21, 0
      %s209 = smul.addr %s206, 2
      %s210 = sadd.s32 %s208, %s209
      %s211 = smul.addr %s210, 8
      %s212 = scalar_lea.vmem %s0, %s211
      %p213 = pneg %p51
      %p214 = pneg %p48
      %p215 = scmp.lt.s32.totalorder %s20, 1
      %s216 = scalar_select %p215, %s20, 1
      %p217 = scmp.lt.s32.totalorder %s21, 0
      %s218 = scalar_select %p217, %s21, 0
      %s219 = smul.addr %s216, 2
      %s220 = sadd.s32 %s218, %s219
      %s221 = smul.addr %s220, 8
      %s222 = scalar_lea.vmem %s1, %s221
      %p223 = pneg %p79
      %p224 = pneg %p76
      %p225 = pneg %p105
      %p226 = pneg %p102
      %p227 = scmp.lt.s32.totalorder %s20, 1
      %s228 = scalar_select %p227, %s20, 1
      %s229 = smul.addr %s228, 2
      %s230 = smul.addr %s229, 8
      %s231 = scalar_lea.vmem %s2, %s230
      %p232 = pneg %p131
      %p233 = pneg %p128
      %p234 = scmp.lt.s32.totalorder %s20, 1
      %s235 = scalar_select %p234, %s20, 1
      %s236 = smul.addr %s235, 2
      %s237 = smul.addr %s236, 8
      %s238 = scalar_lea.vmem %s3, %s237
      %p239 = pneg %p157
      %p240 = pneg %p154
      %p241 = scmp.lt.s32.totalorder %s20, 1
      %s242 = scalar_select %p241, %s20, 1
      %s243 = smul.addr %s242, 8
      %s244 = scalar_lea.vmem %s4, %s243
      %p245 = scmp.lt.s32.totalorder %s20, 1
      %s246 = scalar_select %p245, %s20, 1
      %p247 = scmp.lt.s32.totalorder %s21, 0
      %s248 = scalar_select %p247, %s21, 0
      %s249 = smul.addr %s246, 2
      %s250 = sadd.s32 %s248, %s249
      %s251 = smul.addr %s250, 8
      %s252 = scalar_lea.vmem %s0, %s251
      %p253 = scmp.lt.s32.totalorder %s20, 1
      %s254 = scalar_select %p253, %s20, 1
      %p255 = scmp.lt.s32.totalorder %s21, 0
      %s256 = scalar_select %p255, %s21, 0
      %s257 = smul.addr %s254, 2
      %s258 = sadd.s32 %s256, %s257
      %s259 = smul.addr %s258, 8
      %s260 = scalar_lea.vmem %s1, %s259
      %p261 = scmp.lt.s32.totalorder %s20, 1
      %s262 = scalar_select %p261, %s20, 1
      %s263 = smul.addr %s262, 2
      %s264 = smul.addr %s263, 8
      %s265 = scalar_lea.vmem %s2, %s264
      %p266 = scmp.lt.s32.totalorder %s20, 1
      %s267 = scalar_select %p266, %s20, 1
      %s268 = smul.addr %s267, 2
      %s269 = smul.addr %s268, 8
      %s270 = scalar_lea.vmem %s3, %s269
      %p271 = scmp.lt.s32.totalorder %s20, 1
      %s272 = scalar_select %p271, %s20, 1
      %s273 = smul.addr %s272, 8
      %s274 = scalar_lea.vmem %s4, %s273
      %p275 = scmp.eq.s32.totalorder %s21, 0
      // Predicated region
      $region29: #{loss_flood.1} parent=27 // pred_check
        %p276 = pneg %p275
      $region30: #{loss_flood.1} parent=27 // pred_check_branch
        %278 = sbr.rel (%p276) target = $region32
      $region31: #{loss_flood.1} parent=27 // pred_region
        %279 = vst [vmem:[%s265] sm:$0xff] 0.0
        %280 = vst [vmem:[%s265 + $0x8] sm:$0xff] 0.0
        %281 = vst [vmem:[%s270] sm:$0xff] 0.0
        %282 = vst [vmem:[%s270 + $0x8] sm:$0xff] 0.0
        %283 = vst [vmem:[%s274] sm:$0xff] 0.0
      $region32: #{loss_flood.1} parent=27 // pred_fallthru
        _
      %v284 = vld [vmem:[%s252] sm:$0xff]
      %v285 = vld [vmem:[%s252 + $0x8] sm:$0xff]
      %v286 = vld [vmem:[%s260] sm:$0xff]
      %v287 = vld [vmem:[%s260 + $0x8] sm:$0xff]
      %v288 = vlaneseq
      %v289 = vshrl.u32 %v288, 7
      %v290 = vlaneseq
      %v291 = vand.u32 %v290, 127
      %s292 = smul.u32 %s21, 8
      %v293 = vstv %s292
      %v294 = vadd.s32 %v293, %v289
      %v295 = vmul.u32 %v294, 128
      %v296 = vadd.s32 %v295, %v291
      %vm297 = vcmp.lt.s32.totalorder %v296, 256
      %v298 = vsel %vm297, 1, 0
      %v299 = vcvt.s32.f32 %v298
      %vm300 = vcmp.eq.s32.totalorder %v298, 1
      %v301 = vsel %vm300, %v284, 0.0
      %v302 = vsel %vm300, %v285, 0.0
      %v303 = vsel %vm300, %v286, 0.0
      %v304 = vsel %vm300, %v287, 0.0
      %v305 = vxor.u32 %v301, 2147483648
      %v306 = vxor.u32 %v302, 2147483648
      %v307 = vmul.f32 %v305, 1.442695
      %v308 = vpow.pop %v307
      %v309 = vmul.f32 %v306, 1.442695
      %v310 = vpow.pop %v309
      %v311 = vadd.f32 %v308, 1.0
      %v312 = vadd.f32 %v310, 1.0
      %v313 = vrcp.pop %v311
      %v314 = vmul.f32 1.0, %v313
      %v315 = vrcp.pop %v312
      %v316 = vmul.f32 1.0, %v315
      %v317 = vmul.f32 %v314, %v299
      %v318 = vmul.f32 %v316, %v299
      %v319 = vmul.f32 %v317, %v303
      %v320 = vmul.f32 %v318, %v304
      %v321 = vadd.f32 %v317, %v303
      %v322 = vadd.f32 %v318, %v304
      %v323 = vmax.f32 %v301, %v302
      %v324 = vsub.f32 %v301, %v302
      %v325 = vand.u32 2147483647, %v324
      %v326 = vsub.f32 0.0, %v325
      %v327 = vmul.f32 %v326, 1.442695
      %v328 = vpow.pop %v327
      %v329 = vadd.f32 %v328, 1.0
      %v330 = vlog2.pop %v329
      %v331 = vmul.f32 %v330, 0.6931472
      %v332 = vadd.f32 %v323, %v331
      %v333 = vmul.f32 %v301, %v303
      %v334 = vmul.f32 %v302, %v304
      %v335 = vadd.f32 %v333, %v334
      %v336 = vsub.f32 %v332, %v335
      %v337 = vmul.f32 %v336, %v299
      %v338 = vld [vmem:[%s265] sm:$0xff]
      %v339 = vld [vmem:[%s265 + $0x8] sm:$0xff]
      %v340 = vadd.f32 %v319, 0.0
      %v341 = vadd.f32 %v320, 0.0
      %v342 = vadd.f32 %v338, %v340
      %v343 = vadd.f32 %v339, %v341
      %344 = vst [vmem:[%s265] sm:$0xff] %v342
      %345 = vst [vmem:[%s265 + $0x8] sm:$0xff] %v343
      %v346 = vld [vmem:[%s270] sm:$0xff]
      %v347 = vld [vmem:[%s270 + $0x8] sm:$0xff]
      %v348 = vadd.f32 %v321, 0.0
      %v349 = vadd.f32 %v322, 0.0
      %v350 = vadd.f32 %v346, %v348
      %v351 = vadd.f32 %v347, %v349
      %352 = vst [vmem:[%s270] sm:$0xff] %v350
      %353 = vst [vmem:[%s270 + $0x8] sm:$0xff] %v351
      %v354 = vld [vmem:[%s274] sm:$0xff]
      %v355 = vadd.f32 %v337, 0.0
      %v356 = vadd.f32 %v354, %v355
      %357 = vst [vmem:[%s274] sm:$0xff] %v356
      %p358 = scmp.lt.s32.totalorder %s20, 1
      %s359 = scalar_select %p358, %s20, 1
      %s360 = smul.addr %s359, 2
      %s361 = smul.addr %s360, 8
      %s362 = scalar_lea.vmem %s2, %s361
      %p363 = scmp.lt.s32.totalorder %s20, 1
      %s364 = scalar_select %p363, %s20, 1
      %s365 = smul.addr %s364, 2
      %s366 = smul.addr %s365, 8
      %s367 = scalar_lea.vmem %s3, %s366
      %p368 = scmp.lt.s32.totalorder %s20, 1
      %s369 = scalar_select %p368, %s20, 1
      %s370 = smul.addr %s369, 8
      %s371 = scalar_lea.vmem %s4, %s370
      // Predicated region
      $region33: #{loss_flood.1} parent=27 // pred_check
        %p372 = pneg %p102
      $region34: #{loss_flood.1} parent=27 // pred_check_branch
        %374 = sbr.rel (%p372) target = $region36
      $region35: #{loss_flood.1} parent=27 // pred_region
        _
      $region36: #{loss_flood.1} parent=27 // pred_fallthru
        _
      // Predicated region
      $region37: #{loss_flood.1} parent=27 // pred_check
        %p375 = pneg %p128
      $region38: #{loss_flood.1} parent=27 // pred_check_branch
        %377 = sbr.rel (%p375) target = $region40
      $region39: #{loss_flood.1} parent=27 // pred_region
        _
      $region40: #{loss_flood.1} parent=27 // pred_fallthru
        _
      // Predicated region
      $region41: #{loss_flood.1} parent=27 // pred_check
        %p378 = pneg %p154
      $region42: #{loss_flood.1} parent=27 // pred_check_branch
        %380 = sbr.rel (%p378) target = $region44
      $region43: #{loss_flood.1} parent=27 // pred_region
        _
      $region44: #{loss_flood.1} parent=27 // pred_fallthru
        _
    $region28: #{loss_flood.1} parent=5 // pred_fallthru
      _
    %p381 = scmp.le.s32.totalorder 2, %s11
    // Predicated region
    $region45: #{loss_flood.1} parent=5 // pred_check
      %p382 = pneg %p381
    $region46: #{loss_flood.1} parent=5 // pred_check_branch
      %384 = sbr.rel (%p382) target = $region48
    $region47: #{loss_flood.1} parent=5 // pred_region
      %s385 = ssub.s32 %s11, 2
      // Predicated region
      $region49: #{loss_flood.1} parent=47 // pred_check
        %p386 = pneg %p108
      $region50: #{loss_flood.1} parent=47 // pred_check_branch
        %388 = sbr.rel (%p386) target = $region52
      $region51: #{loss_flood.1} parent=47 // pred_region
        %p389 = scmp.lt.s32.totalorder %s22, 1
        %s390 = scalar_select %p389, %s22, 1
        %s391 = smul.addr %s390, 2
        %s392 = smul.addr %s391, 8
        %s393 = scalar_lea.vmem %s2, %s392
      $region52: #{loss_flood.1} parent=47 // pred_fallthru
        _
      // Predicated region
      $region53: #{loss_flood.1} parent=47 // pred_check
        %p394 = pneg %p134
      $region54: #{loss_flood.1} parent=47 // pred_check_branch
        %396 = sbr.rel (%p394) target = $region56
      $region55: #{loss_flood.1} parent=47 // pred_region
        %p397 = scmp.lt.s32.totalorder %s22, 1
        %s398 = scalar_select %p397, %s22, 1
        %s399 = smul.addr %s398, 2
        %s400 = smul.addr %s399, 8
        %s401 = scalar_lea.vmem %s3, %s400
      $region56: #{loss_flood.1} parent=47 // pred_fallthru
        _
      // Predicated region
      $region57: #{loss_flood.1} parent=47 // pred_check
        %p402 = pneg %p160
      $region58: #{loss_flood.1} parent=47 // pred_check_branch
        %404 = sbr.rel (%p402) target = $region60
      $region59: #{loss_flood.1} parent=47 // pred_region
        %p405 = scmp.lt.s32.totalorder %s22, 1
        %s406 = scalar_select %p405, %s22, 1
        %s407 = smul.addr %s406, 8
        %s408 = scalar_lea.vmem %s4, %s407
      $region60: #{loss_flood.1} parent=47 // pred_fallthru
        _
    $region48: #{loss_flood.1} parent=5 // pred_fallthru
      _
  $region6: #{loss_flood.1} parent=0 // loop_footer
    %s15 = sadd.s32 1, %s11
  $region7: #{loss_flood.1} parent=0 // loop_footer_branch
    %10 = sbr.rel target = $region3
  $region8: #{loss_flood.1} parent=0 // loop_exit
    _

</llo_original>
